<compile_context>
chip_gen: v7x
topology: tpu7x:2x2x1
jax: 0.10.0
libtpu: 0.0.40
codegen_flags: <defaults>
</compile_context>

<pallas_src>
import numpy as np
import jax
import jax.numpy as jnp
from jax.experimental import pallas as pl
from jax.experimental.pallas import tpu as pltpu

LATENT_DIM = 32
WIDTH = 128          # self.width
HIDDEN = 1024        # hidden size fed to decoder_pos
RES = (8, 8)         # decoder_initial_size
NEG_SLOPE = 0.01     # nn.LeakyReLU default


def build_grid(resolution):
    """Same as the PyTorch build_grid: (1, H, W, 4) float32."""
    ranges = [np.linspace(0.0, 1.0, num=r) for r in resolution]
    g = np.meshgrid(*ranges, sparse=False, indexing="ij")
    g = np.stack(g, axis=-1).reshape(resolution[0], resolution[1], -1)
    g = np.expand_dims(g, axis=0).astype(np.float32)
    return np.concatenate([g, 1.0 - g], axis=-1)          # (1, 8, 8, 4)


def _leaky(x):
    return jnp.where(x >= 0, x, NEG_SLOPE * x)


def image_decoder_kernel(z_ref, w1_ref, b1_ref, w2_ref, b2_ref, pos_ref, out_ref):
    """One grid step = one decode. Whole working set (<1.2 MiB) lives in VMEM.

    z_ref   : (8, 32)       f32   per-step latents
    w1_ref  : (32, 128)     f32   grid-resident (constant index_map)
    b1_ref  : (1, 128)      f32   grid-resident
    w2_ref  : (128, 1024)   bf16  grid-resident; dominant DMA halved vs f32
    b2_ref  : (1, 1024)     f32   grid-resident
    pos_ref : (8, 8, 1024)  f32   precomputed grid @ We + be (z-independent)
    out_ref : (8, 8, 1024)  f32   per-step position-embedded output
    """
    # --- MLP hot path: two MXU matmuls (f32 accumulation) + VPU LeakyReLU in f32 ---
    h = _leaky(jnp.dot(z_ref[...], w1_ref[...],
                       preferred_element_type=jnp.float32) + b1_ref[...])      # (8, 128)
    x = _leaky(jnp.dot(h.astype(jnp.bfloat16), w2_ref[...],
                       preferred_element_type=jnp.float32) + b2_ref[...])      # (8, 1024)

    # --- PyTorch broadcast: out[i, j, :] = pos[i, j, :] + x[j, :] ---
    # Single full-block lane-dense store: maximum vld/vadd/vst co-issue freedom.
    out_ref[...] = pos_ref[...] + x[None, :, :]


@jax.jit
def image_decoder_forward(z, fused_params):
    """z: (8, LATENT_DIM) or (K, 8, LATENT_DIM) float32.

    Returns (1, 8, 8, 1024) (single decode, PyTorch-shaped) or (K, 8, 8, 1024)."""
    w1, b1, w2, b2, pos = fused_params
    if z.ndim == 2:
        z = z[None]                                        # single decode -> K = 1
    K = z.shape[0]
    assert z.shape[1] == RES[1], (
        "PyTorch broadcast of (B,1024) with (1,8,8,1024) requires B == 8")

    cost = pl.CostEstimate(
        flops=2 * K * (RES[1] * LATENT_DIM * WIDTH + RES[1] * WIDTH * HIDDEN),
        transcendentals=0,
        bytes_accessed=(w1.size * 4 + b1.size * 4 + w2.size * 2 + b2.size * 4
                        + pos.size * 4
                        + K * (RES[1] * LATENT_DIM * 4
                               + RES[0] * RES[1] * HIDDEN * 4)),
    )

    out = pl.pallas_call(
        image_decoder_kernel,
        out_shape=jax.ShapeDtypeStruct((K, RES[0], RES[1], HIDDEN), jnp.float32),
        grid=(K,),
        in_specs=[
            # per-step latents
            pl.BlockSpec((None, RES[1], LATENT_DIM), lambda k: (k, 0, 0)),
            # weights / biases / pos-emb: constant block index -> VMEM-resident
            pl.BlockSpec((LATENT_DIM, WIDTH), lambda k: (0, 0)),
            pl.BlockSpec((1, WIDTH), lambda k: (0, 0)),
            pl.BlockSpec((WIDTH, HIDDEN), lambda k: (0, 0)),
            pl.BlockSpec((1, HIDDEN), lambda k: (0, 0)),
            pl.BlockSpec((RES[0], RES[1], HIDDEN), lambda k: (0, 0, 0)),
        ],
        out_specs=pl.BlockSpec((None, RES[0], RES[1], HIDDEN),
                               lambda k: (k, 0, 0, 0)),
        compiler_params=pltpu.CompilerParams(
            dimension_semantics=("parallel",)),
        cost_estimate=cost,
    )(z, w1, b1, w2, b2, pos)
    return out                                             # (K, 8, 8, 1024)


def init_params(key):
    """Deterministic PyTorch-style (uniform +-1/sqrt(fan_in)) init."""
    ks = jax.random.split(key, 6)

    def lin(kw, kb, fan_in, fan_out):
        bound = 1.0 / np.sqrt(fan_in)
        w = jax.random.uniform(kw, (fan_in, fan_out), jnp.float32, -bound, bound)
        b = jax.random.uniform(kb, (1, fan_out), jnp.float32, -bound, bound)
        return w, b

    w1, b1 = lin(ks[0], ks[1], LATENT_DIM, WIDTH)    # nn.Linear(latent, 128)
    w2, b2 = lin(ks[2], ks[3], WIDTH, HIDDEN)        # nn.Linear(128, 1024)
    we, be = lin(ks[4], ks[5], 4, HIDDEN)            # SoftPositionEmbed Linear(4,1024)
    grid_flat = jnp.asarray(build_grid(RES)).reshape(RES[0] * RES[1], 4)
    return (w1, b1, w2, b2, we, be, grid_flat)


def fuse_params(params):
    """One-time fusion: precompute the z-independent positional embedding
    grid @ We + be (hoisted out of the kernel) and store w2 in bf16."""
    w1, b1, w2, b2, we, be, grid_flat = params
    pos_emb = (grid_flat @ we + be).reshape(RES[0], RES[1], HIDDEN)   # (8, 8, 1024) f32
    return (w1, b1, w2.astype(jnp.bfloat16), b2, pos_emb)


def reference_forward(z, params):
    """Pure-JAX f32 reference mirroring the PyTorch semantics for one decode."""
    w1, b1, w2, b2, we, be, grid_flat = params
    h = _leaky(z @ w1 + b1)
    x = _leaky(h @ w2 + b2)                                        # (8, 1024)
    grid_emb = (grid_flat @ we + be).reshape(1, RES[0], RES[1], HIDDEN)
    # PyTorch: x (8,1024) -> (1,1,8,1024), broadcast-added to (1,8,8,1024)
    return grid_emb + x.reshape(1, 1, RES[1], HIDDEN)


if __name__ == "__main__":
    key = jax.random.PRNGKey(0)
    kp, kz = jax.random.split(key)
    params = init_params(kp)
    fused = fuse_params(params)

    # Batched decode: K independent latents, each (8, 32).
    K = 4
    zs = jax.random.normal(kz, (K, RES[1], LATENT_DIM), dtype=jnp.float32)

    out = image_decoder_forward(zs, fused)             # (K, 8, 8, 1024)
    out = jax.block_until_ready(out)
    assert out.shape == (K, RES[0], RES[1], HIDDEN), out.shape

    ref = jnp.stack([reference_forward(zs[k], params)[0] for k in range(K)])
    # Tolerance relaxed vs f32-only version because w2 / the second matmul run in
    # bf16 (f32 accumulation) inside the kernel.
    np.testing.assert_allclose(np.asarray(out), np.asarray(ref),
                               rtol=2e-2, atol=2e-2)

    # Single-decode path keeps the PyTorch (1, 8, 8, 1024) output shape.
    out1 = jax.block_until_ready(image_decoder_forward(zs[0], fused))
    assert out1.shape == (1, RES[0], RES[1], HIDDEN), out1.shape
    np.testing.assert_allclose(np.asarray(out1),
                               np.asarray(reference_forward(zs[0], params)),
                               rtol=2e-2, atol=2e-2)

    print("KERNEL_OK")
</pallas_src>

<mosaic_0001>
module attributes {stable_mosaic.version = 11 : i64} {
  func.func @image_decoder_kernel(%arg0: i32, %arg1: memref<1x8x32xf32, #tpu.memory_space<vmem>>, %arg2: memref<32x128xf32, #tpu.memory_space<vmem>>, %arg3: memref<1x128xf32, #tpu.memory_space<vmem>>, %arg4: memref<128x1024xbf16, #tpu.memory_space<vmem>>, %arg5: memref<1x1024xf32, #tpu.memory_space<vmem>>, %arg6: memref<8x8x1024xf32, #tpu.memory_space<vmem>>, %arg7: memref<1x8x8x1024xf32, #tpu.memory_space<vmem>>) attributes {dimension_semantics = [#tpu.dimension_semantics<parallel>], iteration_bounds = array<i64: 4>, scalar_prefetch = 0 : i64, scratch_operands = 0 : i64, tpu.core_type = #tpu.core_type<tc>, window_params = [{transform_indices = @transform_0, window_bounds = array<i64: 1, 8, 32>}, {pipeline_mode = #tpu.pipeline_mode<synchronous>, transform_indices = @transform_1, window_bounds = array<i64: 32, 128>}, {pipeline_mode = #tpu.pipeline_mode<synchronous>, transform_indices = @transform_2, window_bounds = array<i64: 1, 128>}, {pipeline_mode = #tpu.pipeline_mode<synchronous>, transform_indices = @transform_3, window_bounds = array<i64: 128, 1024>}, {pipeline_mode = #tpu.pipeline_mode<synchronous>, transform_indices = @transform_4, window_bounds = array<i64: 1, 1024>}, {pipeline_mode = #tpu.pipeline_mode<synchronous>, transform_indices = @transform_5, window_bounds = array<i64: 8, 8, 1024>}, {transform_indices = @transform_6, window_bounds = array<i64: 1, 8, 8, 1024>}]} {
    %c0 = arith.constant 0 : index
    %c0_0 = arith.constant 0 : index
    %c0_1 = arith.constant 0 : index
    %0 = vector.load %arg1[%c0, %c0_0, %c0_1] : memref<1x8x32xf32, #tpu.memory_space<vmem>>, vector<1x8x32xf32>
    %1 = vector.shape_cast %0 : vector<1x8x32xf32> to vector<8x32xf32>
    %c0_2 = arith.constant 0 : index
    %c0_3 = arith.constant 0 : index
    %2 = vector.load %arg2[%c0_2, %c0_3] : memref<32x128xf32, #tpu.memory_space<vmem>>, vector<32x128xf32>
    %cst = arith.constant dense<0.000000e+00> : vector<8x128xf32>
    %3 = tpu.matmul %1, %2, %cst {dimension_numbers = #tpu.dot_dimension_numbers<[1], [0], [0], [1], [0, 0, 1, 1], [], []>} : vector<8x32xf32>, vector<32x128xf32>, vector<8x128xf32> -> vector<8x128xf32>
    %c0_4 = arith.constant 0 : index
    %c0_5 = arith.constant 0 : index
    %4 = vector.load %arg3[%c0_4, %c0_5] : memref<1x128xf32, #tpu.memory_space<vmem>>, vector<1x128xf32>
    %5 = vector.broadcast %4 : vector<1x128xf32> to vector<8x128xf32>
    %6 = arith.addf %3, %5 : vector<8x128xf32>
    %cst_6 = arith.constant 0.000000e+00 : f32
    %7 = vector.broadcast %cst_6 : f32 to vector<8x128xf32>
    %8 = arith.cmpf oge, %6, %7 : vector<8x128xf32>
    %cst_7 = arith.constant 0.00999999977 : f32
    %9 = vector.broadcast %cst_7 : f32 to vector<8x128xf32>
    %10 = arith.mulf %9, %6 : vector<8x128xf32>
    %11 = arith.select %8, %6, %10 : vector<8x128xi1>, vector<8x128xf32>
    %12 = arith.truncf %11 : vector<8x128xf32> to vector<8x128xbf16>
    %c0_8 = arith.constant 0 : index
    %c0_9 = arith.constant 0 : index
    %13 = vector.load %arg4[%c0_8, %c0_9] : memref<128x1024xbf16, #tpu.memory_space<vmem>>, vector<128x1024xbf16>
    %cst_10 = arith.constant dense<0.000000e+00> : vector<8x1024xf32>
    %14 = tpu.matmul %12, %13, %cst_10 {dimension_numbers = #tpu.dot_dimension_numbers<[1], [0], [0], [1], [0, 0, 1, 1], [], []>} : vector<8x128xbf16>, vector<128x1024xbf16>, vector<8x1024xf32> -> vector<8x1024xf32>
    %c0_11 = arith.constant 0 : index
    %c0_12 = arith.constant 0 : index
    %15 = vector.load %arg5[%c0_11, %c0_12] : memref<1x1024xf32, #tpu.memory_space<vmem>>, vector<1x1024xf32>
    %16 = vector.broadcast %15 : vector<1x1024xf32> to vector<8x1024xf32>
    %17 = arith.addf %14, %16 : vector<8x1024xf32>
    %cst_13 = arith.constant 0.000000e+00 : f32
    %18 = vector.broadcast %cst_13 : f32 to vector<8x1024xf32>
    %19 = arith.cmpf oge, %17, %18 : vector<8x1024xf32>
    %cst_14 = arith.constant 0.00999999977 : f32
    %20 = vector.broadcast %cst_14 : f32 to vector<8x1024xf32>
    %21 = arith.mulf %20, %17 : vector<8x1024xf32>
    %22 = arith.select %19, %17, %21 : vector<8x1024xi1>, vector<8x1024xf32>
    %c0_15 = arith.constant 0 : index
    %c0_16 = arith.constant 0 : index
    %c0_17 = arith.constant 0 : index
    %23 = vector.load %arg6[%c0_15, %c0_16, %c0_17] : memref<8x8x1024xf32, #tpu.memory_space<vmem>>, vector<8x8x1024xf32>
    %24 = vector.shape_cast %22 : vector<8x1024xf32> to vector<1x8x1024xf32>
    %25 = vector.broadcast %24 : vector<1x8x1024xf32> to vector<8x8x1024xf32>
    %26 = arith.addf %23, %25 : vector<8x8x1024xf32>
    %c0_18 = arith.constant 0 : index
    %c0_19 = arith.constant 0 : index
    %c0_20 = arith.constant 0 : index
    %c0_21 = arith.constant 0 : index
    %27 = vector.load %arg7[%c0_18, %c0_19, %c0_20, %c0_21] : memref<1x8x8x1024xf32, #tpu.memory_space<vmem>>, vector<1x8x8x1024xf32>
    %28 = vector.shape_cast %27 : vector<1x8x8x1024xf32> to vector<8x8x1024xf32>
    %29 = vector.shape_cast %26 : vector<8x8x1024xf32> to vector<1x8x8x1024xf32>
    tpu.vector_store %arg7[%c0_18, %c0_19, %c0_20, %c0_21], %29 {strides = array<i32>} : memref<1x8x8x1024xf32, #tpu.memory_space<vmem>>, vector<1x8x8x1024xf32>,
    return
  }
  func.func @transform_0(%arg0: i32) -> (i32, i32, i32) {
    %c0_i32 = arith.constant 0 : i32
    %c0_i32_0 = arith.constant 0 : i32
    %c0_i32_1 = arith.constant 0 : i32
    return %arg0, %c0_i32, %c0_i32_0 : i32, i32, i32
  }
  func.func @transform_1(%arg0: i32) -> (i32, i32) {
    %c0_i32 = arith.constant 0 : i32
    %c0_i32_0 = arith.constant 0 : i32
    %c0_i32_1 = arith.constant 0 : i32
    return %c0_i32, %c0_i32_0 : i32, i32
  }
  func.func @transform_2(%arg0: i32) -> (i32, i32) {
    %c0_i32 = arith.constant 0 : i32
    %c0_i32_0 = arith.constant 0 : i32
    %c0_i32_1 = arith.constant 0 : i32
    return %c0_i32, %c0_i32_0 : i32, i32
  }
  func.func @transform_3(%arg0: i32) -> (i32, i32) {
    %c0_i32 = arith.constant 0 : i32
    %c0_i32_0 = arith.constant 0 : i32
    %c0_i32_1 = arith.constant 0 : i32
    return %c0_i32, %c0_i32_0 : i32, i32
  }
  func.func @transform_4(%arg0: i32) -> (i32, i32) {
    %c0_i32 = arith.constant 0 : i32
    %c0_i32_0 = arith.constant 0 : i32
    %c0_i32_1 = arith.constant 0 : i32
    return %c0_i32, %c0_i32_0 : i32, i32
  }
  func.func @transform_5(%arg0: i32) -> (i32, i32, i32) {
    %c0_i32 = arith.constant 0 : i32
    %c0_i32_0 = arith.constant 0 : i32
    %c0_i32_1 = arith.constant 0 : i32
    %c0_i32_2 = arith.constant 0 : i32
    return %c0_i32, %c0_i32_0, %c0_i32_1 : i32, i32, i32
  }
  func.func @transform_6(%arg0: i32) -> (i32, i32, i32, i32) {
    %c0_i32 = arith.constant 0 : i32
    %c0_i32_0 = arith.constant 0 : i32
    %c0_i32_1 = arith.constant 0 : i32
    %c0_i32_2 = arith.constant 0 : i32
    return %arg0, %c0_i32, %c0_i32_0, %c0_i32_1 : i32, i32, i32, i32
  }
}

</mosaic_0001>

<llo_original>
// kernel: image_decoder_forward.1
$region0: #{image_decoder_forward.1}
  #allocation0 [shape = 'u32[]', space=smem, size = 0x4, offset = 0x4, fixed_abs, tag = 'smem constant byte address 0x4 - core index']
  #allocation1 [shape = 'u32[144,128]{1,0:T(1,128)}', space=vmem, size = 0x12000, scoped, tag = 'internal scratch']
  %s0 = inlined_call_operand.hbm [shape: f32[4,8,32], index: 0, kind: input, shape index: {}]
  %s1 = inlined_call_operand.hbm [shape: f32[32,128], index: 1, kind: input, shape index: {}]
  %s2 = inlined_call_operand.vmem [shape: f32[1,128], index: 2, kind: input, shape index: {}]
  %s3 = inlined_call_operand.hbm [shape: bf16[128,1024], index: 3, kind: input, shape index: {}]
  %s4 = inlined_call_operand.vmem [shape: f32[1,1024], index: 4, kind: input, shape index: {}]
  %s5 = inlined_call_operand.hbm [shape: f32[8,8,1024], index: 5, kind: input, shape index: {}]
  %s6 = inlined_call_operand.hbm [shape: f32[4,8,8,1024], index: 6, kind: output, shape index: {}]
  %s7 = sld [smem:[#allocation0]]
  $region73: #{image_decoder_forward.1} parent=0
    _
  %s9 = ssub.s32 1, %s7
  %s10 = scalar_select 0, %s9, %s7
  $region1: #{image_decoder_forward.1} parent=0
    #allocation2 [shape = 'u8[8192]{0}', space=vmem, size = 0x2000, scoped, tag = 'input window, operand 0']
    #allocation3 [shape = 's32[2]{0}', space=sflag, size = 0x8, scoped, tag = 'scoped memory for image_decoder_forward.1']
    #allocation4 [shape = 's32[2]{0}', space=sflag, size = 0x8, scoped, tag = 'scoped memory for image_decoder_forward.1']
    #allocation5 [shape = 'u8[16384]{0}', space=vmem, size = 0x4000, scoped, tag = 'input window, operand 1, single buffered']
    #allocation6 [shape = 's32[1]{0}', space=sflag, size = 0x4, scoped, tag = 'scoped memory for image_decoder_forward.1']
    #allocation7 [shape = 'u8[262144]{0}', space=vmem, size = 0x40000, scoped, tag = 'input window, operand 3, single buffered']
    #allocation8 [shape = 'u8[262144]{0}', space=vmem, size = 0x40000, scoped, tag = 'input window, operand 5, single buffered']
    #allocation9 [shape = 's32[1]{0}', space=sflag, size = 0x4, scoped, tag = 'scoped memory for image_decoder_forward.1']
    #allocation10 [shape = 'u8[524288]{0}', space=vmem, size = 0x80000, scoped, tag = 'output window, operand 0']
    %11 = vsyncpa [#allocation3], 0
    %s12 = scalar_lea.sflag [#allocation3], 1
    %13 = vsyncpa %s12, 0
    %14 = vsyncpa [#allocation6], 0
    %15 = vsyncpa [#allocation9], 0
    %16 = vsyncpa [#allocation4], 0
    %s17 = scalar_lea.sflag [#allocation4], 1
    %18 = vsyncpa %s17, 0
    loop: start=0, step=1, limit=6
    $region2: #{image_decoder_forward.1} parent=1 // loop_pre_header
      _
    $region3: #{image_decoder_forward.1} parent=1 // loop_header
      %s20 = sphi 0, %s24
      %p21 = scmp.ge.s32.totalorder %s20, 6
      %s30 = sphi 0, %s32
      %s33 = sphi 0, %s30
      %s34 = sphi 0, %s33
      %s50 = sphi 0, %s34
      %s54 = sphi 0, %s54
      %s56 = sphi 0, %s54
      %s57 = sphi 0, %s56
      %s71 = sphi 0, %s57
      %s75 = sphi 0, %s75
      %s77 = sphi 0, %s75
      %s78 = sphi 0, %s77
      %s92 = sphi 0, %s78
      %s96 = sphi 0, %s96
      %s98 = sphi 0, %s96
      %s99 = sphi 0, %s98
      %s113 = sphi 0, %s99
      %s117 = sphi 0, %s117
      %s119 = sphi 0, %s117
      %s120 = sphi 0, %s119
      %s134 = sphi 0, %s120
      %s138 = sphi 0, %s138
      %s140 = sphi 0, %s138
      %s141 = sphi 0, %s140
      %s155 = sphi 0, %s141
      %s161 = sphi 0, %s163
      %s164 = sphi 0, %s161
      %s165 = sphi 0, %s164
      %s181 = sphi 0, %s165
    $region4: #{image_decoder_forward.1} parent=1 // loop_header_branch
      %23 = sbr.rel (%p21) target = $region8
    $region5: #{image_decoder_forward.1} parent=1 // loop_body
      %s25 = ssub.s32 %s20, 1
      %s26 = ssub.s32 %s20, 2
      %s27 = sadd.s32 %s20, 1
      %s28 = ssub.s32 %s20, %s27
      %p29 = scmp.eq.s32.totalorder %s28, 0
      %s31 = sadd.s32 %s30, 1
      %s32 = scalar_select %p29, %s30, %s31
      %p35 = pneg %p29
      %p36 = scmp.eq.s32.totalorder %s20, 3
      %p37 = por %p35, %p36
      %p38 = scmp.ne.s32.totalorder %s30, %s33
      %p39 = scmp.eq.s32.totalorder %s20, 0
      %p40 = por %p38, %p39
      %p41 = scmp.ne.s32.totalorder %s30, %s33
      %p42 = scmp.eq.s32.totalorder %s25, 3
      %p43 = por %p41, %p42
      %p44 = scmp.ne.s32.totalorder %s33, %s34
      %p45 = scmp.eq.s32.totalorder %s25, 0
      %p46 = por %p44, %p45
      %p47 = scmp.ne.s32.totalorder %s33, %s34
      %p48 = scmp.eq.s32.totalorder %s26, 3
      %p49 = por %p47, %p48
      %p51 = scmp.ne.s32.totalorder %s34, %s50
      %p52 = scmp.eq.s32.totalorder %s26, 0
      %p53 = por %p51, %p52
      %s55 = sadd.s32 %s54, 1
      %p58 = scmp.eq.s32.totalorder %s20, 3
      %p59 = scmp.ne.s32.totalorder %s54, %s56
      %p60 = scmp.eq.s32.totalorder %s20, 0
      %p61 = por %p59, %p60
      %p62 = scmp.ne.s32.totalorder %s54, %s56
      %p63 = scmp.eq.s32.totalorder %s25, 3
      %p64 = por %p62, %p63
      %p65 = scmp.ne.s32.totalorder %s56, %s57
      %p66 = scmp.eq.s32.totalorder %s25, 0
      %p67 = por %p65, %p66
      %p68 = scmp.ne.s32.totalorder %s56, %s57
      %p69 = scmp.eq.s32.totalorder %s26, 3
      %p70 = por %p68, %p69
      %p72 = scmp.ne.s32.totalorder %s57, %s71
      %p73 = scmp.eq.s32.totalorder %s26, 0
      %p74 = por %p72, %p73
      %s76 = sadd.s32 %s75, 1
      %p79 = scmp.eq.s32.totalorder %s20, 3
      %p80 = scmp.ne.s32.totalorder %s75, %s77
      %p81 = scmp.eq.s32.totalorder %s20, 0
      %p82 = por %p80, %p81
      %p83 = scmp.ne.s32.totalorder %s75, %s77
      %p84 = scmp.eq.s32.totalorder %s25, 3
      %p85 = por %p83, %p84
      %p86 = scmp.ne.s32.totalorder %s77, %s78
      %p87 = scmp.eq.s32.totalorder %s25, 0
      %p88 = por %p86, %p87
      %p89 = scmp.ne.s32.totalorder %s77, %s78
      %p90 = scmp.eq.s32.totalorder %s26, 3
      %p91 = por %p89, %p90
      %p93 = scmp.ne.s32.totalorder %s78, %s92
      %p94 = scmp.eq.s32.totalorder %s26, 0
      %p95 = por %p93, %p94
      %s97 = sadd.s32 %s96, 1
      %p100 = scmp.eq.s32.totalorder %s20, 3
      %p101 = scmp.ne.s32.totalorder %s96, %s98
      %p102 = scmp.eq.s32.totalorder %s20, 0
      %p103 = por %p101, %p102
      %p104 = scmp.ne.s32.totalorder %s96, %s98
      %p105 = scmp.eq.s32.totalorder %s25, 3
      %p106 = por %p104, %p105
      %p107 = scmp.ne.s32.totalorder %s98, %s99
      %p108 = scmp.eq.s32.totalorder %s25, 0
      %p109 = por %p107, %p108
      %p110 = scmp.ne.s32.totalorder %s98, %s99
      %p111 = scmp.eq.s32.totalorder %s26, 3
      %p112 = por %p110, %p111
      %p114 = scmp.ne.s32.totalorder %s99, %s113
      %p115 = scmp.eq.s32.totalorder %s26, 0
      %p116 = por %p114, %p115
      %s118 = sadd.s32 %s117, 1
      %p121 = scmp.eq.s32.totalorder %s20, 3
      %p122 = scmp.ne.s32.totalorder %s117, %s119
      %p123 = scmp.eq.s32.totalorder %s20, 0
      %p124 = por %p122, %p123
      %p125 = scmp.ne.s32.totalorder %s117, %s119
      %p126 = scmp.eq.s32.totalorder %s25, 3
      %p127 = por %p125, %p126
      %p128 = scmp.ne.s32.totalorder %s119, %s120
      %p129 = scmp.eq.s32.totalorder %s25, 0
      %p130 = por %p128, %p129
      %p131 = scmp.ne.s32.totalorder %s119, %s120
      %p132 = scmp.eq.s32.totalorder %s26, 3
      %p133 = por %p131, %p132
      %p135 = scmp.ne.s32.totalorder %s120, %s134
      %p136 = scmp.eq.s32.totalorder %s26, 0
      %p137 = por %p135, %p136
      %s139 = sadd.s32 %s138, 1
      %p142 = scmp.eq.s32.totalorder %s20, 3
      %p143 = scmp.ne.s32.totalorder %s138, %s140
      %p144 = scmp.eq.s32.totalorder %s20, 0
      %p145 = por %p143, %p144
      %p146 = scmp.ne.s32.totalorder %s138, %s140
      %p147 = scmp.eq.s32.totalorder %s25, 3
      %p148 = por %p146, %p147
      %p149 = scmp.ne.s32.totalorder %s140, %s141
      %p150 = scmp.eq.s32.totalorder %s25, 0
      %p151 = por %p149, %p150
      %p152 = scmp.ne.s32.totalorder %s140, %s141
      %p153 = scmp.eq.s32.totalorder %s26, 3
      %p154 = por %p152, %p153
      %p156 = scmp.ne.s32.totalorder %s141, %s155
      %p157 = scmp.eq.s32.totalorder %s26, 0
      %p158 = por %p156, %p157
      %s159 = ssub.s32 %s20, %s27
      %p160 = scmp.eq.s32.totalorder %s159, 0
      %s162 = sadd.s32 %s161, 1
      %s163 = scalar_select %p160, %s161, %s162
      %p166 = pneg %p160
      %p167 = scmp.eq.s32.totalorder %s20, 3
      %p168 = por %p166, %p167
      %p169 = scmp.ne.s32.totalorder %s161, %s164
      %p170 = scmp.eq.s32.totalorder %s20, 0
      %p171 = por %p169, %p170
      %p172 = scmp.ne.s32.totalorder %s161, %s164
      %p173 = scmp.eq.s32.totalorder %s25, 3
      %p174 = por %p172, %p173
      %p175 = scmp.ne.s32.totalorder %s164, %s165
      %p176 = scmp.eq.s32.totalorder %s25, 0
      %p177 = por %p175, %p176
      %p178 = scmp.ne.s32.totalorder %s164, %s165
      %p179 = scmp.eq.s32.totalorder %s26, 3
      %p180 = por %p178, %p179
      %p182 = scmp.ne.s32.totalorder %s165, %s181
      %p183 = scmp.eq.s32.totalorder %s26, 0
      %p184 = por %p182, %p183
      %p185 = scmp.le.s32.totalorder 1, %s20
      %p186 = scmp.lt.s32.totalorder %s20, 5
      %p187 = pnand %p185, %p186
      %p188 = pneg %p187
      // Predicated region
      $region9: #{image_decoder_forward.1} parent=5 // pred_check
        _
      $region10: #{image_decoder_forward.1} parent=5 // pred_check_branch
        %190 = sbr.rel (%p187) target = $region12
      $region11: #{image_decoder_forward.1} parent=5 // pred_region
        %s191 = ssub.s32 %s20, 1
        // Predicated region
        $region13: #{image_decoder_forward.1} parent=11 // pred_check
          %p192 = pneg %p67
        $region14: #{image_decoder_forward.1} parent=11 // pred_check_branch
          %194 = sbr.rel (%p192) target = $region16
        $region15: #{image_decoder_forward.1} parent=11 // pred_region
          %s196 = ssub.s32 512, 512
          %197 = vsyncadd [#allocation6], %s196
          %s198 = sshll.u32 [#allocation5], 4
          %s199 = int_to_ptr.vmem [resolvable:$true] %s198
          %204 = dma.hbm_to_vmem [thread:$0]  %s1, 512, %s199, [#allocation6], 128, 128, 8
        $region16: #{image_decoder_forward.1} parent=11 // pred_fallthru
          _
        // Predicated region
        $region17: #{image_decoder_forward.1} parent=11 // pred_check
          %p205 = pneg %p88
        $region18: #{image_decoder_forward.1} parent=11 // pred_check_branch
          %207 = sbr.rel (%p205) target = $region20
        $region19: #{image_decoder_forward.1} parent=11 // pred_region
          _
        $region20: #{image_decoder_forward.1} parent=11 // pred_fallthru
          _
        // Predicated region
        $region21: #{image_decoder_forward.1} parent=11 // pred_check
          %p208 = pneg %p109
        $region22: #{image_decoder_forward.1} parent=11 // pred_check_branch
          %210 = sbr.rel (%p208) target = $region24
        $region23: #{image_decoder_forward.1} parent=11 // pred_region
          %s212 = ssub.s32 8192, 8192
          %213 = vsyncadd [#allocation6], %s212
          %s214 = sshll.u32 [#allocation7], 4
          %s215 = int_to_ptr.vmem [resolvable:$true] %s214
          %220 = dma.hbm_to_vmem [thread:$0]  %s3, 8192, %s215, [#allocation6], 512, 512, 32
        $region24: #{image_decoder_forward.1} parent=11 // pred_fallthru
          _
        // Predicated region
        $region25: #{image_decoder_forward.1} parent=11 // pred_check
          %p221 = pneg %p130
        $region26: #{image_decoder_forward.1} parent=11 // pred_check_branch
          %223 = sbr.rel (%p221) target = $region28
        $region27: #{image_decoder_forward.1} parent=11 // pred_region
          _
        $region28: #{image_decoder_forward.1} parent=11 // pred_fallthru
          _
        // Predicated region
        $region29: #{image_decoder_forward.1} parent=11 // pred_check
          %p224 = pneg %p151
        $region30: #{image_decoder_forward.1} parent=11 // pred_check_branch
          %226 = sbr.rel (%p224) target = $region32
        $region31: #{image_decoder_forward.1} parent=11 // pred_region
          %s228 = ssub.s32 8192, 8192
          %229 = vsyncadd [#allocation9], %s228
          %s230 = sshll.u32 [#allocation8], 4
          %s231 = int_to_ptr.vmem [resolvable:$true] %s230
          %236 = dma.hbm_to_vmem [thread:$0]  %s5, 8192, %s231, [#allocation9], 1024, 1024, 64
        $region32: #{image_decoder_forward.1} parent=11 // pred_fallthru
          _
      $region12: #{image_decoder_forward.1} parent=5 // pred_fallthru
        _
      %p237 = scmp.lt.s32.totalorder %s20, 4
      // Predicated region
      $region33: #{image_decoder_forward.1} parent=5 // pred_check
        %p238 = pneg %p237
      $region34: #{image_decoder_forward.1} parent=5 // pred_check_branch
        %240 = sbr.rel (%p238) target = $region36
      $region35: #{image_decoder_forward.1} parent=5 // pred_region
        // Predicated region
        $region37: #{image_decoder_forward.1} parent=35 // pred_check
          %p241 = pneg %p40
        $region38: #{image_decoder_forward.1} parent=35 // pred_check_branch
          %243 = sbr.rel (%p241) target = $region40
        $region39: #{image_decoder_forward.1} parent=35 // pred_region
          %s244 = sand.u32 %s30, 1
          %s245 = scalar_lea.sflag [#allocation3], %s244
          %s246 = sand.u32 %s30, 1
          %s247 = smul.addr %s246, 8
          %s248 = scalar_lea.vmem [#allocation2], %s247
          %s250 = ssub.s32 128, 128
          %251 = vsyncadd %s245, %s250
          %s252 = smul.addr %s20, 128
          %s253 = scalar_lea.hbm %s0, %s252
          %s255 = sshll.u32 %s248, 4
          %s256 = int_to_ptr.vmem [resolvable:$true] %s255
          %258 = dma.hbm_to_vmem [thread:$0]  %s253, 128, %s256, %s245
        $region40: #{image_decoder_forward.1} parent=35 // pred_fallthru
          _
      $region36: #{image_decoder_forward.1} parent=5 // pred_fallthru
        _
      %p259 = scmp.le.s32.totalorder 1, %s20
      %p260 = scmp.lt.s32.totalorder %s20, 5
      %p261 = pnand %p259, %p260
      %p262 = pneg %p261
      // Predicated region
      $region41: #{image_decoder_forward.1} parent=5 // pred_check
        _
      $region42: #{image_decoder_forward.1} parent=5 // pred_check_branch
        %264 = sbr.rel (%p261) target = $region44
      $region43: #{image_decoder_forward.1} parent=5 // pred_region
        %s265 = ssub.s32 %s20, 1
        %s266 = sand.u32 %s33, 1
        %s267 = scalar_lea.sflag [#allocation3], %s266
        %s268 = sand.u32 %s33, 1
        %s269 = smul.addr %s268, 8
        %s270 = scalar_lea.vmem [#allocation2], %s269
        // Predicated region
        $region45: #{image_decoder_forward.1} parent=43 // pred_check
          %p271 = pneg %p46
        $region46: #{image_decoder_forward.1} parent=43 // pred_check_branch
          %273 = sbr.rel (%p271) target = $region48
        $region47: #{image_decoder_forward.1} parent=43 // pred_region
          %274 = dma.done %s267, 128
        $region48: #{image_decoder_forward.1} parent=43 // pred_fallthru
          _
        // Predicated region
        $region49: #{image_decoder_forward.1} parent=43 // pred_check
          %p275 = pneg %p67
        $region50: #{image_decoder_forward.1} parent=43 // pred_check_branch
          %277 = sbr.rel (%p275) target = $region52
        $region51: #{image_decoder_forward.1} parent=43 // pred_region
          %278 = dma.done [#allocation6], 512
        $region52: #{image_decoder_forward.1} parent=43 // pred_fallthru
          _
        // Predicated region
        $region53: #{image_decoder_forward.1} parent=43 // pred_check
          %p279 = pneg %p109
        $region54: #{image_decoder_forward.1} parent=43 // pred_check_branch
          %281 = sbr.rel (%p279) target = $region56
        $region55: #{image_decoder_forward.1} parent=43 // pred_region
          %282 = dma.done [#allocation6], 8192
        $region56: #{image_decoder_forward.1} parent=43 // pred_fallthru
          _
        // Predicated region
        $region57: #{image_decoder_forward.1} parent=43 // pred_check
          %p283 = pneg %p151
        $region58: #{image_decoder_forward.1} parent=43 // pred_check_branch
          %285 = sbr.rel (%p283) target = $region60
        $region59: #{image_decoder_forward.1} parent=43 // pred_region
          %286 = dma.done [#allocation9], 8192
        $region60: #{image_decoder_forward.1} parent=43 // pred_fallthru
          _
        %s287 = sand.u32 %s33, 1
        %s288 = scalar_lea.sflag [#allocation3], %s287
        %s289 = sand.u32 %s33, 1
        %s290 = smul.addr %s289, 8
        %s291 = scalar_lea.vmem [#allocation2], %s290
        %p292 = pneg %p46
        %p293 = pneg %p43
        %p294 = pneg %p67
        %p295 = pneg %p64
        %p296 = pneg %p88
        %p297 = pneg %p85
        %p298 = pneg %p109
        %p299 = pneg %p106
        %p300 = pneg %p130
        %p301 = pneg %p127
        %p302 = pneg %p151
        %p303 = pneg %p148
        %p304 = pneg %p177
        %p305 = pneg %p174
        %s306 = sand.u32 %s164, 1
        %s307 = scalar_lea.sflag [#allocation4], %s306
        %s308 = sand.u32 %s164, 1
        %s309 = smul.addr %s308, 512
        %s310 = scalar_lea.vmem [#allocation10], %s309
        %v312 = vld [vmem:[%s270] sm:$0xff]
        %v313 = vld [vmem:[#allocation5] sm:$0xff]
        %v314 = vld [vmem:[#allocation5 + $0x8] sm:$0xff]
        %v315 = vld [vmem:[#allocation5 + $0x10] sm:$0xff]
        %v316 = vld [vmem:[#allocation5 + $0x18] sm:$0xff]
        %v317 = vld [vmem:[%s2] sm:$0x1]
        %v319 = vlaneseq
        %v320 = vshrl.u32 %v319, 7
        %v321 = vsub.s32 0, %v320
        %v322 = vrot.slane %v317, %v321
        %vm324 = vcmask 261120
        %v326 = vsel %vm324, %v312, 0
        %328 = vmatprep.subr.mxu0 0.0
        %329 = vmatpush1.msra.mxu0 %v313
        %330 = vmatprep.subr.mxu0 0.0
        %331 = vmatpush1.msra.mxu0 %v314
        %332 = vmatprep.subr.mxu0 0.0
        %333 = vmatpush1.msra.mxu0 %v315
        %334 = vmatprep.subr.mxu0 0.0
        %335 = vmatpush1.msra.mxu0 %v316
        %336 = vmatprep.subr.mxu0 0.0
        %337 = vmatpush1.msra.mxu0 0.0
        %338 = vmatprep.subr.mxu0 0.0
        %339 = vmatpush1.msra.mxu0 0.0
        %340 = vmatprep.subr.mxu0 0.0
        %341 = vmatpush1.msra.mxu0 0.0
        %342 = vmatprep.subr.mxu0 0.0
        %343 = vmatpush1.msra.mxu0 0.0
        %344 = vmatprep.subr.mxu0 0.0
        %345 = vmatpush1.msra.mxu0 0.0
        %346 = vmatprep.subr.mxu0 0.0
        %347 = vmatpush1.msra.mxu0 0.0
        %348 = vmatprep.subr.mxu0 0.0
        %349 = vmatpush1.msra.mxu0 0.0
        %350 = vmatprep.subr.mxu0 0.0
        %351 = vmatpush1.msra.mxu0 0.0
        %352 = vmatprep.subr.mxu0 0.0
        %353 = vmatpush1.msra.mxu0 0.0
        %354 = vmatprep.subr.mxu0 0.0
        %355 = vmatpush1.msra.mxu0 0.0
        %356 = vmatprep.subr.mxu0 0.0
        %357 = vmatpush1.msra.mxu0 0.0
        %358 = vmatprep.subr.mxu0 0.0
        %359 = vmatpush1.msra.mxu0 0.0
        %360 = vmatprep.subr.mxu0 0.0
        %361 = vmatpush1.msra.mxu0 0.0
        %362 = vmatprep.subr.mxu0 0.0
        %363 = vmatpush1.msra.mxu0 0.0
        %364 = vmatprep.subr.mxu0 0.0
        %365 = vmatpush1.msra.mxu0 0.0
        %366 = vmatprep.subr.mxu0 0.0
        %367 = vmatpush1.msra.mxu0 0.0
        %368 = vmatprep.subr.mxu0 0.0
        %369 = vmatpush1.msra.mxu0 0.0
        %370 = vmatprep.subr.mxu0 0.0
        %371 = vmatpush1.msra.mxu0 0.0
        %372 = vmatprep.subr.mxu0 0.0
        %373 = vmatpush1.msra.mxu0 0.0
        %374 = vmatprep.subr.mxu0 0.0
        %375 = vmatpush1.msra.mxu0 0.0
        %376 = vmatprep.subr.mxu0 0.0
        %377 = vmatpush1.msra.mxu0 0.0
        %378 = vmatprep.subr.mxu0 0.0
        %379 = vmatpush1.msra.mxu0 0.0
        %380 = vmatprep.subr.mxu0 0.0
        %381 = vmatpush1.msra.mxu0 0.0
        %382 = vmatprep.subr.mxu0 0.0
        %383 = vmatpush1.msra.mxu0 0.0
        %384 = vmatprep.subr.mxu0 0.0
        %385 = vmatpush1.msra.mxu0 0.0
        %386 = vmatprep.subr.mxu0 0.0
        %387 = vmatpush1.msra.mxu0 0.0
        %388 = vmatprep.subr.mxu0 0.0
        %389 = vmatpush1.msra.mxu0 0.0
        %390 = vmatprep.subr.mxu0 0.0
        %391 = vmatpush1.msra.mxu0 0.0
        %392 = vmatprep.mubr.f32.mxu0 0.0
        %393 = vmatmul.mubr.f32.gmra.mrb[0].mxu0 %v326
        %v394 = vpop.f32.mrb[0].mxu0
        %v395 = vadd.f32 %v322, %v394
        %v396 = vpop.f32.mrb[0].mxu0
        %397 = vdwg.mxu0
        %vm398 = vcmp.ge.f32.partialorder %v395, 0.0
        %v399 = vmul.f32 %v395, 0.01
        %v400 = vsel %vm398, %v395, %v399
        %v401 = vpack.c.bf16 %v400, %v400
        %v402 = vld [vmem:[#allocation7] sm:$0xff]
        %v403 = vld [vmem:[#allocation7 + $0x8] sm:$0xff]
        %v404 = vld [vmem:[#allocation7 + $0x10] sm:$0xff]
        %v405 = vld [vmem:[#allocation7 + $0x18] sm:$0xff]
        %v406 = vld [vmem:[#allocation7 + $0x20] sm:$0xff]
        %v407 = vld [vmem:[#allocation7 + $0x28] sm:$0xff]
        %v408 = vld [vmem:[#allocation7 + $0x30] sm:$0xff]
        %v409 = vld [vmem:[#allocation7 + $0x38] sm:$0xff]
        %v410 = vld [vmem:[#allocation7 + $0x40] sm:$0xff]
        %v411 = vld [vmem:[#allocation7 + $0x48] sm:$0xff]
        %v412 = vld [vmem:[#allocation7 + $0x50] sm:$0xff]
        %v413 = vld [vmem:[#allocation7 + $0x58] sm:$0xff]
        %v414 = vld [vmem:[#allocation7 + $0x60] sm:$0xff]
        %v415 = vld [vmem:[#allocation7 + $0x68] sm:$0xff]
        %v416 = vld [vmem:[#allocation7 + $0x70] sm:$0xff]
        %v417 = vld [vmem:[#allocation7 + $0x78] sm:$0xff]
        %v418 = vld [vmem:[#allocation7 + $0x80] sm:$0xff]
        %v419 = vld [vmem:[#allocation7 + $0x88] sm:$0xff]
        %v420 = vld [vmem:[#allocation7 + $0x90] sm:$0xff]
        %v421 = vld [vmem:[#allocation7 + $0x98] sm:$0xff]
        %v422 = vld [vmem:[#allocation7 + $0xa0] sm:$0xff]
        %v423 = vld [vmem:[#allocation7 + $0xa8] sm:$0xff]
        %v424 = vld [vmem:[#allocation7 + $0xb0] sm:$0xff]
        %v425 = vld [vmem:[#allocation7 + $0xb8] sm:$0xff]
        %v426 = vld [vmem:[#allocation7 + $0xc0] sm:$0xff]
        %v427 = vld [vmem:[#allocation7 + $0xc8] sm:$0xff]
        %v428 = vld [vmem:[#allocation7 + $0xd0] sm:$0xff]
        %v429 = vld [vmem:[#allocation7 + $0xd8] sm:$0xff]
        %v430 = vld [vmem:[#allocation7 + $0xe0] sm:$0xff]
        %v431 = vld [vmem:[#allocation7 + $0xe8] sm:$0xff]
        %v432 = vld [vmem:[#allocation7 + $0xf0] sm:$0xff]
        %v433 = vld [vmem:[#allocation7 + $0xf8] sm:$0xff]
        %v434 = vld [vmem:[#allocation7 + $0x100] sm:$0xff]
        %v435 = vld [vmem:[#allocation7 + $0x108] sm:$0xff]
        %v436 = vld [vmem:[#allocation7 + $0x110] sm:$0xff]
        %v437 = vld [vmem:[#allocation7 + $0x118] sm:$0xff]
        %v438 = vld [vmem:[#allocation7 + $0x120] sm:$0xff]
        %v439 = vld [vmem:[#allocation7 + $0x128] sm:$0xff]
        %v440 = vld [vmem:[#allocation7 + $0x130] sm:$0xff]
        %v441 = vld [vmem:[#allocation7 + $0x138] sm:$0xff]
        %v442 = vld [vmem:[#allocation7 + $0x140] sm:$0xff]
        %v443 = vld [vmem:[#allocation7 + $0x148] sm:$0xff]
        %v444 = vld [vmem:[#allocation7 + $0x150] sm:$0xff]
        %v445 = vld [vmem:[#allocation7 + $0x158] sm:$0xff]
        %v446 = vld [vmem:[#allocation7 + $0x160] sm:$0xff]
        %v447 = vld [vmem:[#allocation7 + $0x168] sm:$0xff]
        %v448 = vld [vmem:[#allocation7 + $0x170] sm:$0xff]
        %v449 = vld [vmem:[#allocation7 + $0x178] sm:$0xff]
        %v450 = vld [vmem:[#allocation7 + $0x180] sm:$0xff]
        %v451 = vld [vmem:[#allocation7 + $0x188] sm:$0xff]
        %v452 = vld [vmem:[#allocation7 + $0x190] sm:$0xff]
        %v453 = vld [vmem:[#allocation7 + $0x198] sm:$0xff]
        %v454 = vld [vmem:[#allocation7 + $0x1a0] sm:$0xff]
        %v455 = vld [vmem:[#allocation7 + $0x1a8] sm:$0xff]
        %v456 = vld [vmem:[#allocation7 + $0x1b0] sm:$0xff]
        %v457 = vld [vmem:[#allocation7 + $0x1b8] sm:$0xff]
        %v458 = vld [vmem:[#allocation7 + $0x1c0] sm:$0xff]
        %v459 = vld [vmem:[#allocation7 + $0x1c8] sm:$0xff]
        %v460 = vld [vmem:[#allocation7 + $0x1d0] sm:$0xff]
        %v461 = vld [vmem:[#allocation7 + $0x1d8] sm:$0xff]
        %v462 = vld [vmem:[#allocation7 + $0x1e0] sm:$0xff]
        %v463 = vld [vmem:[#allocation7 + $0x1e8] sm:$0xff]
        %v464 = vld [vmem:[#allocation7 + $0x1f0] sm:$0xff]
        %v465 = vld [vmem:[#allocation7 + $0x1f8] sm:$0xff]
        %v466 = vld [vmem:[%s4] sm:$0xff]
        %v468 = vlaneseq
        %v469 = vshrl.u32 %v468, 7
        %v470 = vsub.s32 0, %v469
        %v471 = vrot.slane %v466, %v470
        %v472 = vlaneseq
        %v473 = vshrl.u32 %v472, 7
        %v474 = vsub.s32 1, %v473
        %v475 = vrot.slane %v466, %v474
        %v476 = vlaneseq
        %v477 = vshrl.u32 %v476, 7
        %v478 = vsub.s32 2, %v477
        %v479 = vrot.slane %v466, %v478
        %v480 = vlaneseq
        %v481 = vshrl.u32 %v480, 7
        %v482 = vsub.s32 3, %v481
        %v483 = vrot.slane %v466, %v482
        %v484 = vlaneseq
        %v485 = vshrl.u32 %v484, 7
        %v486 = vsub.s32 4, %v485
        %v487 = vrot.slane %v466, %v486
        %v488 = vlaneseq
        %v489 = vshrl.u32 %v488, 7
        %v490 = vsub.s32 5, %v489
        %v491 = vrot.slane %v466, %v490
        %v492 = vlaneseq
        %v493 = vshrl.u32 %v492, 7
        %v494 = vsub.s32 6, %v493
        %v495 = vrot.slane %v466, %v494
        %v496 = vlaneseq
        %v497 = vshrl.u32 %v496, 7
        %v498 = vsub.s32 7, %v497
        %v499 = vrot.slane %v466, %v498
        %v572 = vunpack.c.l.b16 %v402
        %v573 = vunpack.c.h.b16 %v402
        %v574 = vunpack.c.l.b16 %v403
        %v575 = vunpack.c.h.b16 %v403
        %v576 = vunpack.c.l.b16 %v404
        %v577 = vunpack.c.h.b16 %v404
        %v578 = vunpack.c.l.b16 %v405
        %v579 = vunpack.c.h.b16 %v405
        %v580 = vunpack.c.l.b16 %v406
        %v581 = vunpack.c.h.b16 %v406
        %v582 = vunpack.c.l.b16 %v407
        %v583 = vunpack.c.h.b16 %v407
        %v584 = vunpack.c.l.b16 %v408
        %v585 = vunpack.c.h.b16 %v408
        %v586 = vunpack.c.l.b16 %v409
        %v587 = vunpack.c.h.b16 %v409
        %v588 = vunpack.c.l.b16 %v410
        %v589 = vunpack.c.h.b16 %v410
        %v590 = vunpack.c.l.b16 %v411
        %v591 = vunpack.c.h.b16 %v411
        %v592 = vunpack.c.l.b16 %v412
        %v593 = vunpack.c.h.b16 %v412
        %v594 = vunpack.c.l.b16 %v413
        %v595 = vunpack.c.h.b16 %v413
        %v596 = vunpack.c.l.b16 %v414
        %v597 = vunpack.c.h.b16 %v414
        %v598 = vunpack.c.l.b16 %v415
        %v599 = vunpack.c.h.b16 %v415
        %v600 = vunpack.c.l.b16 %v416
        %v601 = vunpack.c.h.b16 %v416
        %v602 = vunpack.c.l.b16 %v417
        %v603 = vunpack.c.h.b16 %v417
        %v604 = vunpack.c.l.b16 %v418
        %v605 = vunpack.c.h.b16 %v418
        %v606 = vunpack.c.l.b16 %v419
        %v607 = vunpack.c.h.b16 %v419
        %v608 = vunpack.c.l.b16 %v420
        %v609 = vunpack.c.h.b16 %v420
        %v610 = vunpack.c.l.b16 %v421
        %v611 = vunpack.c.h.b16 %v421
        %v612 = vunpack.c.l.b16 %v422
        %v613 = vunpack.c.h.b16 %v422
        %v614 = vunpack.c.l.b16 %v423
        %v615 = vunpack.c.h.b16 %v423
        %v616 = vunpack.c.l.b16 %v424
        %v617 = vunpack.c.h.b16 %v424
        %v618 = vunpack.c.l.b16 %v425
        %v619 = vunpack.c.h.b16 %v425
        %v620 = vunpack.c.l.b16 %v426
        %v621 = vunpack.c.h.b16 %v426
        %v622 = vunpack.c.l.b16 %v427
        %v623 = vunpack.c.h.b16 %v427
        %v624 = vunpack.c.l.b16 %v428
        %v625 = vunpack.c.h.b16 %v428
        %v626 = vunpack.c.l.b16 %v429
        %v627 = vunpack.c.h.b16 %v429
        %v628 = vunpack.c.l.b16 %v430
        %v629 = vunpack.c.h.b16 %v430
        %v630 = vunpack.c.l.b16 %v431
        %v631 = vunpack.c.h.b16 %v431
        %v632 = vunpack.c.l.b16 %v432
        %v633 = vunpack.c.h.b16 %v432
        %v634 = vunpack.c.l.b16 %v433
        %v635 = vunpack.c.h.b16 %v433
        %v636 = vunpack.c.l.b16 %v434
        %v637 = vunpack.c.h.b16 %v434
        %v638 = vunpack.c.l.b16 %v435
        %v639 = vunpack.c.h.b16 %v435
        %v640 = vunpack.c.l.b16 %v436
        %v641 = vunpack.c.h.b16 %v436
        %v642 = vunpack.c.l.b16 %v437
        %v643 = vunpack.c.h.b16 %v437
        %v644 = vunpack.c.l.b16 %v438
        %v645 = vunpack.c.h.b16 %v438
        %v646 = vunpack.c.l.b16 %v439
        %v647 = vunpack.c.h.b16 %v439
        %v648 = vunpack.c.l.b16 %v440
        %v649 = vunpack.c.h.b16 %v440
        %v650 = vunpack.c.l.b16 %v441
        %v651 = vunpack.c.h.b16 %v441
        %v652 = vunpack.c.l.b16 %v442
        %v653 = vunpack.c.h.b16 %v442
        %v654 = vunpack.c.l.b16 %v443
        %v655 = vunpack.c.h.b16 %v443
        %v656 = vunpack.c.l.b16 %v444
        %v657 = vunpack.c.h.b16 %v444
        %v658 = vunpack.c.l.b16 %v445
        %v659 = vunpack.c.h.b16 %v445
        %v660 = vunpack.c.l.b16 %v446
        %v661 = vunpack.c.h.b16 %v446
        %v662 = vunpack.c.l.b16 %v447
        %v663 = vunpack.c.h.b16 %v447
        %v664 = vunpack.c.l.b16 %v448
        %v665 = vunpack.c.h.b16 %v448
        %v666 = vunpack.c.l.b16 %v449
        %v667 = vunpack.c.h.b16 %v449
        %v668 = vunpack.c.l.b16 %v450
        %v669 = vunpack.c.h.b16 %v450
        %v670 = vunpack.c.l.b16 %v451
        %v671 = vunpack.c.h.b16 %v451
        %v672 = vunpack.c.l.b16 %v452
        %v673 = vunpack.c.h.b16 %v452
        %v674 = vunpack.c.l.b16 %v453
        %v675 = vunpack.c.h.b16 %v453
        %v676 = vunpack.c.l.b16 %v454
        %v677 = vunpack.c.h.b16 %v454
        %v678 = vunpack.c.l.b16 %v455
        %v679 = vunpack.c.h.b16 %v455
        %v680 = vunpack.c.l.b16 %v456
        %v681 = vunpack.c.h.b16 %v456
        %v682 = vunpack.c.l.b16 %v457
        %v683 = vunpack.c.h.b16 %v457
        %v684 = vunpack.c.l.b16 %v458
        %v685 = vunpack.c.h.b16 %v458
        %v686 = vunpack.c.l.b16 %v459
        %v687 = vunpack.c.h.b16 %v459
        %v688 = vunpack.c.l.b16 %v460
        %v689 = vunpack.c.h.b16 %v460
        %v690 = vunpack.c.l.b16 %v461
        %v691 = vunpack.c.h.b16 %v461
        %v692 = vunpack.c.l.b16 %v462
        %v693 = vunpack.c.h.b16 %v462
        %v694 = vunpack.c.l.b16 %v463
        %v695 = vunpack.c.h.b16 %v463
        %v696 = vunpack.c.l.b16 %v464
        %v697 = vunpack.c.h.b16 %v464
        %v698 = vunpack.c.l.b16 %v465
        %v699 = vunpack.c.h.b16 %v465
        %v700 = vpack.c.b16 %v580, %v572
        %v701 = vpack.c.b16 %v581, %v573
        %v702 = vpack.c.b16 %v582, %v574
        %v703 = vpack.c.b16 %v583, %v575
        %v704 = vpack.c.b16 %v584, %v576
        %v705 = vpack.c.b16 %v585, %v577
        %v706 = vpack.c.b16 %v586, %v578
        %v707 = vpack.c.b16 %v587, %v579
        %v708 = vpack.c.b16 %v596, %v588
        %v709 = vpack.c.b16 %v597, %v589
        %v710 = vpack.c.b16 %v598, %v590
        %v711 = vpack.c.b16 %v599, %v591
        %v712 = vpack.c.b16 %v600, %v592
        %v713 = vpack.c.b16 %v601, %v593
        %v714 = vpack.c.b16 %v602, %v594
        %v715 = vpack.c.b16 %v603, %v595
        %v716 = vpack.c.b16 %v612, %v604
        %v717 = vpack.c.b16 %v613, %v605
        %v718 = vpack.c.b16 %v614, %v606
        %v719 = vpack.c.b16 %v615, %v607
        %v720 = vpack.c.b16 %v616, %v608
        %v721 = vpack.c.b16 %v617, %v609
        %v722 = vpack.c.b16 %v618, %v610
        %v723 = vpack.c.b16 %v619, %v611
        %v724 = vpack.c.b16 %v628, %v620
        %v725 = vpack.c.b16 %v629, %v621
        %v726 = vpack.c.b16 %v630, %v622
        %v727 = vpack.c.b16 %v631, %v623
        %v728 = vpack.c.b16 %v632, %v624
        %v729 = vpack.c.b16 %v633, %v625
        %v730 = vpack.c.b16 %v634, %v626
        %v731 = vpack.c.b16 %v635, %v627
        %v732 = vpack.c.b16 %v644, %v636
        %v733 = vpack.c.b16 %v645, %v637
        %v734 = vpack.c.b16 %v646, %v638
        %v735 = vpack.c.b16 %v647, %v639
        %v736 = vpack.c.b16 %v648, %v640
        %v737 = vpack.c.b16 %v649, %v641
        %v738 = vpack.c.b16 %v650, %v642
        %v739 = vpack.c.b16 %v651, %v643
        %v740 = vpack.c.b16 %v660, %v652
        %v741 = vpack.c.b16 %v661, %v653
        %v742 = vpack.c.b16 %v662, %v654
        %v743 = vpack.c.b16 %v663, %v655
        %v744 = vpack.c.b16 %v664, %v656
        %v745 = vpack.c.b16 %v665, %v657
        %v746 = vpack.c.b16 %v666, %v658
        %v747 = vpack.c.b16 %v667, %v659
        %v748 = vpack.c.b16 %v676, %v668
        %v749 = vpack.c.b16 %v677, %v669
        %v750 = vpack.c.b16 %v678, %v670
        %v751 = vpack.c.b16 %v679, %v671
        %v752 = vpack.c.b16 %v680, %v672
        %v753 = vpack.c.b16 %v681, %v673
        %v754 = vpack.c.b16 %v682, %v674
        %v755 = vpack.c.b16 %v683, %v675
        %v756 = vpack.c.b16 %v692, %v684
        %v757 = vpack.c.b16 %v693, %v685
        %v758 = vpack.c.b16 %v694, %v686
        %v759 = vpack.c.b16 %v695, %v687
        %v760 = vpack.c.b16 %v696, %v688
        %v761 = vpack.c.b16 %v697, %v689
        %v762 = vpack.c.b16 %v698, %v690
        %v763 = vpack.c.b16 %v699, %v691
        %828 = vmatprep.subr.bf16.mxu0 %v701
        %829 = vmatpush1.bf16.msra.mxu0 %v700
        %830 = vmatprep.subr.bf16.mxu0 %v709
        %831 = vmatpush1.bf16.msra.mxu0 %v708
        %832 = vmatprep.subr.bf16.mxu0 %v717
        %833 = vmatpush1.bf16.msra.mxu0 %v716
        %834 = vmatprep.subr.bf16.mxu0 %v725
        %835 = vmatpush1.bf16.msra.mxu0 %v724
        %836 = vmatprep.subr.bf16.mxu0 %v733
        %837 = vmatpush1.bf16.msra.mxu0 %v732
        %838 = vmatprep.subr.bf16.mxu0 %v741
        %839 = vmatpush1.bf16.msra.mxu0 %v740
        %840 = vmatprep.subr.bf16.mxu0 %v749
        %841 = vmatpush1.bf16.msra.mxu0 %v748
        %842 = vmatprep.subr.bf16.mxu0 %v757
        %843 = vmatpush1.bf16.msra.mxu0 %v756
        %844 = vmatprep.subr.bf16.mxu0 0
        %845 = vmatpush1.bf16.msra.mxu0 0
        %846 = vmatprep.subr.bf16.mxu0 0
        %847 = vmatpush1.bf16.msra.mxu0 0
        %848 = vmatprep.subr.bf16.mxu0 0
        %849 = vmatpush1.bf16.msra.mxu0 0
        %850 = vmatprep.subr.bf16.mxu0 0
        %851 = vmatpush1.bf16.msra.mxu0 0
        %852 = vmatprep.subr.bf16.mxu0 0
        %853 = vmatpush1.bf16.msra.mxu0 0
        %854 = vmatprep.subr.bf16.mxu0 0
        %855 = vmatpush1.bf16.msra.mxu0 0
        %856 = vmatprep.subr.bf16.mxu0 0
        %857 = vmatpush1.bf16.msra.mxu0 0
        %858 = vmatprep.subr.bf16.mxu0 0
        %859 = vmatpush1.bf16.msra.mxu0 0
        %860 = vmatprep.mubr.bf16.mxu0 0
        %861 = vmatmul.mubr.bf16.gmra.mrb[0].mxu0 %v401
        %v862 = vpop.f32.mrb[0].mxu0
        %v863 = vadd.f32 %v471, %v862
        %v864 = vpop.f32.mrb[0].mxu0
        %v865 = vadd.f32 %v475, %v864
        %v866 = vpop.f32.mrb[0].mxu0
        %v867 = vpop.f32.mrb[0].mxu0
        %868 = vdwg.mxu0
        %869 = vmatprep.subr.bf16.mxu0 %v703
        %870 = vmatpush1.bf16.msra.mxu0 %v702
        %871 = vmatprep.subr.bf16.mxu0 %v711
        %872 = vmatpush1.bf16.msra.mxu0 %v710
        %873 = vmatprep.subr.bf16.mxu0 %v719
        %874 = vmatpush1.bf16.msra.mxu0 %v718
        %875 = vmatprep.subr.bf16.mxu0 %v727
        %876 = vmatpush1.bf16.msra.mxu0 %v726
        %877 = vmatprep.subr.bf16.mxu0 %v735
        %878 = vmatpush1.bf16.msra.mxu0 %v734
        %879 = vmatprep.subr.bf16.mxu0 %v743
        %880 = vmatpush1.bf16.msra.mxu0 %v742
        %881 = vmatprep.subr.bf16.mxu0 %v751
        %882 = vmatpush1.bf16.msra.mxu0 %v750
        %883 = vmatprep.subr.bf16.mxu0 %v759
        %884 = vmatpush1.bf16.msra.mxu0 %v758
        %885 = vmatprep.subr.bf16.mxu0 0
        %886 = vmatpush1.bf16.msra.mxu0 0
        %887 = vmatprep.subr.bf16.mxu0 0
        %888 = vmatpush1.bf16.msra.mxu0 0
        %889 = vmatprep.subr.bf16.mxu0 0
        %890 = vmatpush1.bf16.msra.mxu0 0
        %891 = vmatprep.subr.bf16.mxu0 0
        %892 = vmatpush1.bf16.msra.mxu0 0
        %893 = vmatprep.subr.bf16.mxu0 0
        %894 = vmatpush1.bf16.msra.mxu0 0
        %895 = vmatprep.subr.bf16.mxu0 0
        %896 = vmatpush1.bf16.msra.mxu0 0
        %897 = vmatprep.subr.bf16.mxu0 0
        %898 = vmatpush1.bf16.msra.mxu0 0
        %899 = vmatprep.subr.bf16.mxu0 0
        %900 = vmatpush1.bf16.msra.mxu0 0
        %901 = vmatprep.mubr.bf16.mxu0 0
        %902 = vmatmul.mubr.bf16.gmra.mrb[0].mxu0 %v401
        %v903 = vpop.f32.mrb[0].mxu0
        %v904 = vadd.f32 %v479, %v903
        %v905 = vpop.f32.mrb[0].mxu0
        %v906 = vadd.f32 %v483, %v905
        %v907 = vpop.f32.mrb[0].mxu0
        %v908 = vpop.f32.mrb[0].mxu0
        %909 = vdwg.mxu0
        %910 = vmatprep.subr.bf16.mxu0 %v705
        %911 = vmatpush1.bf16.msra.mxu0 %v704
        %912 = vmatprep.subr.bf16.mxu0 %v713
        %913 = vmatpush1.bf16.msra.mxu0 %v712
        %914 = vmatprep.subr.bf16.mxu0 %v721
        %915 = vmatpush1.bf16.msra.mxu0 %v720
        %916 = vmatprep.subr.bf16.mxu0 %v729
        %917 = vmatpush1.bf16.msra.mxu0 %v728
        %918 = vmatprep.subr.bf16.mxu0 %v737
        %919 = vmatpush1.bf16.msra.mxu0 %v736
        %920 = vmatprep.subr.bf16.mxu0 %v745
        %921 = vmatpush1.bf16.msra.mxu0 %v744
        %922 = vmatprep.subr.bf16.mxu0 %v753
        %923 = vmatpush1.bf16.msra.mxu0 %v752
        %924 = vmatprep.subr.bf16.mxu0 %v761
        %925 = vmatpush1.bf16.msra.mxu0 %v760
        %926 = vmatprep.subr.bf16.mxu0 0
        %927 = vmatpush1.bf16.msra.mxu0 0
        %928 = vmatprep.subr.bf16.mxu0 0
        %929 = vmatpush1.bf16.msra.mxu0 0
        %930 = vmatprep.subr.bf16.mxu0 0
        %931 = vmatpush1.bf16.msra.mxu0 0
        %932 = vmatprep.subr.bf16.mxu0 0
        %933 = vmatpush1.bf16.msra.mxu0 0
        %934 = vmatprep.subr.bf16.mxu0 0
        %935 = vmatpush1.bf16.msra.mxu0 0
        %936 = vmatprep.subr.bf16.mxu0 0
        %937 = vmatpush1.bf16.msra.mxu0 0
        %938 = vmatprep.subr.bf16.mxu0 0
        %939 = vmatpush1.bf16.msra.mxu0 0
        %940 = vmatprep.subr.bf16.mxu0 0
        %941 = vmatpush1.bf16.msra.mxu0 0
        %942 = vmatprep.mubr.bf16.mxu0 0
        %943 = vmatmul.mubr.bf16.gmra.mrb[0].mxu0 %v401
        %v944 = vpop.f32.mrb[0].mxu0
        %v945 = vadd.f32 %v487, %v944
        %v946 = vpop.f32.mrb[0].mxu0
        %v947 = vadd.f32 %v491, %v946
        %v948 = vpop.f32.mrb[0].mxu0
        %v949 = vpop.f32.mrb[0].mxu0
        %950 = vdwg.mxu0
        %951 = vmatprep.subr.bf16.mxu0 %v707
        %952 = vmatpush1.bf16.msra.mxu0 %v706
        %953 = vmatprep.subr.bf16.mxu0 %v715
        %954 = vmatpush1.bf16.msra.mxu0 %v714
        %955 = vmatprep.subr.bf16.mxu0 %v723
        %956 = vmatpush1.bf16.msra.mxu0 %v722
        %957 = vmatprep.subr.bf16.mxu0 %v731
        %958 = vmatpush1.bf16.msra.mxu0 %v730
        %959 = vmatprep.subr.bf16.mxu0 %v739
        %960 = vmatpush1.bf16.msra.mxu0 %v738
        %961 = vmatprep.subr.bf16.mxu0 %v747
        %962 = vmatpush1.bf16.msra.mxu0 %v746
        %963 = vmatprep.subr.bf16.mxu0 %v755
        %964 = vmatpush1.bf16.msra.mxu0 %v754
        %965 = vmatprep.subr.bf16.mxu0 %v763
        %966 = vmatpush1.bf16.msra.mxu0 %v762
        %967 = vmatprep.subr.bf16.mxu0 0
        %968 = vmatpush1.bf16.msra.mxu0 0
        %969 = vmatprep.subr.bf16.mxu0 0
        %970 = vmatpush1.bf16.msra.mxu0 0
        %971 = vmatprep.subr.bf16.mxu0 0
        %972 = vmatpush1.bf16.msra.mxu0 0
        %973 = vmatprep.subr.bf16.mxu0 0
        %974 = vmatpush1.bf16.msra.mxu0 0
        %975 = vmatprep.subr.bf16.mxu0 0
        %976 = vmatpush1.bf16.msra.mxu0 0
        %977 = vmatprep.subr.bf16.mxu0 0
        %978 = vmatpush1.bf16.msra.mxu0 0
        %979 = vmatprep.subr.bf16.mxu0 0
        %980 = vmatpush1.bf16.msra.mxu0 0
        %981 = vmatprep.subr.bf16.mxu0 0
        %982 = vmatpush1.bf16.msra.mxu0 0
        %983 = vmatprep.mubr.bf16.mxu0 0
        %984 = vmatmul.mubr.bf16.gmra.mrb[0].mxu0 %v401
        %v985 = vpop.f32.mrb[0].mxu0
        %v986 = vadd.f32 %v495, %v985
        %v987 = vpop.f32.mrb[0].mxu0
        %v988 = vadd.f32 %v499, %v987
        %v989 = vpop.f32.mrb[0].mxu0
        %v990 = vpop.f32.mrb[0].mxu0
        %991 = vdwg.mxu0
        %vm992 = vcmp.ge.f32.partialorder %v863, 0.0
        %vm993 = vcmp.ge.f32.partialorder %v865, 0.0
        %vm994 = vcmp.ge.f32.partialorder %v904, 0.0
        %vm995 = vcmp.ge.f32.partialorder %v906, 0.0
        %vm996 = vcmp.ge.f32.partialorder %v945, 0.0
        %vm997 = vcmp.ge.f32.partialorder %v947, 0.0
        %vm998 = vcmp.ge.f32.partialorder %v986, 0.0
        %vm999 = vcmp.ge.f32.partialorder %v988, 0.0
        %v1000 = vmul.f32 %v863, 0.01
        %v1001 = vmul.f32 %v865, 0.01
        %v1002 = vmul.f32 %v904, 0.01
        %v1003 = vmul.f32 %v906, 0.01
        %v1004 = vmul.f32 %v945, 0.01
        %v1005 = vmul.f32 %v947, 0.01
        %v1006 = vmul.f32 %v986, 0.01
        %v1007 = vmul.f32 %v988, 0.01
        %v1008 = vsel %vm992, %v863, %v1000
        %v1009 = vsel %vm993, %v865, %v1001
        %v1010 = vsel %vm994, %v904, %v1002
        %v1011 = vsel %vm995, %v906, %v1003
        %v1012 = vsel %vm996, %v945, %v1004
        %v1013 = vsel %vm997, %v947, %v1005
        %v1014 = vsel %vm998, %v986, %v1006
        %v1015 = vsel %vm999, %v988, %v1007
        %v1016 = vld [vmem:[#allocation8] sm:$0xff]
        %v1017 = vld [vmem:[#allocation8 + $0x8] sm:$0xff]
        %v1018 = vld [vmem:[#allocation8 + $0x10] sm:$0xff]
        %v1019 = vld [vmem:[#allocation8 + $0x18] sm:$0xff]
        %v1020 = vld [vmem:[#allocation8 + $0x20] sm:$0xff]
        %v1021 = vld [vmem:[#allocation8 + $0x28] sm:$0xff]
        %v1022 = vld [vmem:[#allocation8 + $0x30] sm:$0xff]
        %v1023 = vld [vmem:[#allocation8 + $0x38] sm:$0xff]
        %v1024 = vld [vmem:[#allocation8 + $0x40] sm:$0xff]
        %v1025 = vld [vmem:[#allocation8 + $0x48] sm:$0xff]
        %v1026 = vld [vmem:[#allocation8 + $0x50] sm:$0xff]
        %v1027 = vld [vmem:[#allocation8 + $0x58] sm:$0xff]
        %v1028 = vld [vmem:[#allocation8 + $0x60] sm:$0xff]
        %v1029 = vld [vmem:[#allocation8 + $0x68] sm:$0xff]
        %v1030 = vld [vmem:[#allocation8 + $0x70] sm:$0xff]
        %v1031 = vld [vmem:[#allocation8 + $0x78] sm:$0xff]
        %v1032 = vld [vmem:[#allocation8 + $0x80] sm:$0xff]
        %v1033 = vld [vmem:[#allocation8 + $0x88] sm:$0xff]
        %v1034 = vld [vmem:[#allocation8 + $0x90] sm:$0xff]
        %v1035 = vld [vmem:[#allocation8 + $0x98] sm:$0xff]
        %v1036 = vld [vmem:[#allocation8 + $0xa0] sm:$0xff]
        %v1037 = vld [vmem:[#allocation8 + $0xa8] sm:$0xff]
        %v1038 = vld [vmem:[#allocation8 + $0xb0] sm:$0xff]
        %v1039 = vld [vmem:[#allocation8 + $0xb8] sm:$0xff]
        %v1040 = vld [vmem:[#allocation8 + $0xc0] sm:$0xff]
        %v1041 = vld [vmem:[#allocation8 + $0xc8] sm:$0xff]
        %v1042 = vld [vmem:[#allocation8 + $0xd0] sm:$0xff]
        %v1043 = vld [vmem:[#allocation8 + $0xd8] sm:$0xff]
        %v1044 = vld [vmem:[#allocation8 + $0xe0] sm:$0xff]
        %v1045 = vld [vmem:[#allocation8 + $0xe8] sm:$0xff]
        %v1046 = vld [vmem:[#allocation8 + $0xf0] sm:$0xff]
        %v1047 = vld [vmem:[#allocation8 + $0xf8] sm:$0xff]
        %v1048 = vld [vmem:[#allocation8 + $0x100] sm:$0xff]
        %v1049 = vld [vmem:[#allocation8 + $0x108] sm:$0xff]
        %v1050 = vld [vmem:[#allocation8 + $0x110] sm:$0xff]
        %v1051 = vld [vmem:[#allocation8 + $0x118] sm:$0xff]
        %v1052 = vld [vmem:[#allocation8 + $0x120] sm:$0xff]
        %v1053 = vld [vmem:[#allocation8 + $0x128] sm:$0xff]
        %v1054 = vld [vmem:[#allocation8 + $0x130] sm:$0xff]
        %v1055 = vld [vmem:[#allocation8 + $0x138] sm:$0xff]
        %v1056 = vld [vmem:[#allocation8 + $0x140] sm:$0xff]
        %v1057 = vld [vmem:[#allocation8 + $0x148] sm:$0xff]
        %v1058 = vld [vmem:[#allocation8 + $0x150] sm:$0xff]
        %v1059 = vld [vmem:[#allocation8 + $0x158] sm:$0xff]
        %v1060 = vld [vmem:[#allocation8 + $0x160] sm:$0xff]
        %v1061 = vld [vmem:[#allocation8 + $0x168] sm:$0xff]
        %v1062 = vld [vmem:[#allocation8 + $0x170] sm:$0xff]
        %v1063 = vld [vmem:[#allocation8 + $0x178] sm:$0xff]
        %v1064 = vld [vmem:[#allocation8 + $0x180] sm:$0xff]
        %v1065 = vld [vmem:[#allocation8 + $0x188] sm:$0xff]
        %v1066 = vld [vmem:[#allocation8 + $0x190] sm:$0xff]
        %v1067 = vld [vmem:[#allocation8 + $0x198] sm:$0xff]
        %v1068 = vld [vmem:[#allocation8 + $0x1a0] sm:$0xff]
        %v1069 = vld [vmem:[#allocation8 + $0x1a8] sm:$0xff]
        %v1070 = vld [vmem:[#allocation8 + $0x1b0] sm:$0xff]
        %v1071 = vld [vmem:[#allocation8 + $0x1b8] sm:$0xff]
        %v1072 = vld [vmem:[#allocation8 + $0x1c0] sm:$0xff]
        %v1073 = vld [vmem:[#allocation8 + $0x1c8] sm:$0xff]
        %v1074 = vld [vmem:[#allocation8 + $0x1d0] sm:$0xff]
        %v1075 = vld [vmem:[#allocation8 + $0x1d8] sm:$0xff]
        %v1076 = vld [vmem:[#allocation8 + $0x1e0] sm:$0xff]
        %v1077 = vld [vmem:[#allocation8 + $0x1e8] sm:$0xff]
        %v1078 = vld [vmem:[#allocation8 + $0x1f0] sm:$0xff]
        %v1079 = vld [vmem:[#allocation8 + $0x1f8] sm:$0xff]
        %v1080 = vadd.f32 %v1016, %v1008
        %v1081 = vadd.f32 %v1017, %v1009
        %v1082 = vadd.f32 %v1018, %v1010
        %v1083 = vadd.f32 %v1019, %v1011
        %v1084 = vadd.f32 %v1020, %v1012
        %v1085 = vadd.f32 %v1021, %v1013
        %v1086 = vadd.f32 %v1022, %v1014
        %v1087 = vadd.f32 %v1023, %v1015
        %v1088 = vadd.f32 %v1024, %v1008
        %v1089 = vadd.f32 %v1025, %v1009
        %v1090 = vadd.f32 %v1026, %v1010
        %v1091 = vadd.f32 %v1027, %v1011
        %v1092 = vadd.f32 %v1028, %v1012
        %v1093 = vadd.f32 %v1029, %v1013
        %v1094 = vadd.f32 %v1030, %v1014
        %v1095 = vadd.f32 %v1031, %v1015
        %v1096 = vadd.f32 %v1032, %v1008
        %v1097 = vadd.f32 %v1033, %v1009
        %v1098 = vadd.f32 %v1034, %v1010
        %v1099 = vadd.f32 %v1035, %v1011
        %v1100 = vadd.f32 %v1036, %v1012
        %v1101 = vadd.f32 %v1037, %v1013
        %v1102 = vadd.f32 %v1038, %v1014
        %v1103 = vadd.f32 %v1039, %v1015
        %v1104 = vadd.f32 %v1040, %v1008
        %v1105 = vadd.f32 %v1041, %v1009
        %v1106 = vadd.f32 %v1042, %v1010
        %v1107 = vadd.f32 %v1043, %v1011
        %v1108 = vadd.f32 %v1044, %v1012
        %v1109 = vadd.f32 %v1045, %v1013
        %v1110 = vadd.f32 %v1046, %v1014
        %v1111 = vadd.f32 %v1047, %v1015
        %v1112 = vadd.f32 %v1048, %v1008
        %v1113 = vadd.f32 %v1049, %v1009
        %v1114 = vadd.f32 %v1050, %v1010
        %v1115 = vadd.f32 %v1051, %v1011
        %v1116 = vadd.f32 %v1052, %v1012
        %v1117 = vadd.f32 %v1053, %v1013
        %v1118 = vadd.f32 %v1054, %v1014
        %v1119 = vadd.f32 %v1055, %v1015
        %v1120 = vadd.f32 %v1056, %v1008
        %v1121 = vadd.f32 %v1057, %v1009
        %v1122 = vadd.f32 %v1058, %v1010
        %v1123 = vadd.f32 %v1059, %v1011
        %v1124 = vadd.f32 %v1060, %v1012
        %v1125 = vadd.f32 %v1061, %v1013
        %v1126 = vadd.f32 %v1062, %v1014
        %v1127 = vadd.f32 %v1063, %v1015
        %v1128 = vadd.f32 %v1064, %v1008
        %v1129 = vadd.f32 %v1065, %v1009
        %v1130 = vadd.f32 %v1066, %v1010
        %v1131 = vadd.f32 %v1067, %v1011
        %v1132 = vadd.f32 %v1068, %v1012
        %v1133 = vadd.f32 %v1069, %v1013
        %v1134 = vadd.f32 %v1070, %v1014
        %v1135 = vadd.f32 %v1071, %v1015
        %v1136 = vadd.f32 %v1072, %v1008
        %v1137 = vadd.f32 %v1073, %v1009
        %v1138 = vadd.f32 %v1074, %v1010
        %v1139 = vadd.f32 %v1075, %v1011
        %v1140 = vadd.f32 %v1076, %v1012
        %v1141 = vadd.f32 %v1077, %v1013
        %v1142 = vadd.f32 %v1078, %v1014
        %v1143 = vadd.f32 %v1079, %v1015
        %1144 = vst [vmem:[%s310] sm:$0xff] %v1080
        %1145 = vst [vmem:[%s310 + $0x8] sm:$0xff] %v1081
        %1146 = vst [vmem:[%s310 + $0x10] sm:$0xff] %v1082
        %1147 = vst [vmem:[%s310 + $0x18] sm:$0xff] %v1083
        %1148 = vst [vmem:[%s310 + $0x20] sm:$0xff] %v1084
        %1149 = vst [vmem:[%s310 + $0x28] sm:$0xff] %v1085
        %1150 = vst [vmem:[%s310 + $0x30] sm:$0xff] %v1086
        %1151 = vst [vmem:[%s310 + $0x38] sm:$0xff] %v1087
        %1152 = vst [vmem:[%s310 + $0x40] sm:$0xff] %v1088
        %1153 = vst [vmem:[%s310 + $0x48] sm:$0xff] %v1089
        %1154 = vst [vmem:[%s310 + $0x50] sm:$0xff] %v1090
        %1155 = vst [vmem:[%s310 + $0x58] sm:$0xff] %v1091
        %1156 = vst [vmem:[%s310 + $0x60] sm:$0xff] %v1092
        %1157 = vst [vmem:[%s310 + $0x68] sm:$0xff] %v1093
        %1158 = vst [vmem:[%s310 + $0x70] sm:$0xff] %v1094
        %1159 = vst [vmem:[%s310 + $0x78] sm:$0xff] %v1095
        %1160 = vst [vmem:[%s310 + $0x80] sm:$0xff] %v1096
        %1161 = vst [vmem:[%s310 + $0x88] sm:$0xff] %v1097
        %1162 = vst [vmem:[%s310 + $0x90] sm:$0xff] %v1098
        %1163 = vst [vmem:[%s310 + $0x98] sm:$0xff] %v1099
        %1164 = vst [vmem:[%s310 + $0xa0] sm:$0xff] %v1100
        %1165 = vst [vmem:[%s310 + $0xa8] sm:$0xff] %v1101
        %1166 = vst [vmem:[%s310 + $0xb0] sm:$0xff] %v1102
        %1167 = vst [vmem:[%s310 + $0xb8] sm:$0xff] %v1103
        %1168 = vst [vmem:[%s310 + $0xc0] sm:$0xff] %v1104
        %1169 = vst [vmem:[%s310 + $0xc8] sm:$0xff] %v1105
        %1170 = vst [vmem:[%s310 + $0xd0] sm:$0xff] %v1106
        %1171 = vst [vmem:[%s310 + $0xd8] sm:$0xff] %v1107
        %1172 = vst [vmem:[%s310 + $0xe0] sm:$0xff] %v1108
        %1173 = vst [vmem:[%s310 + $0xe8] sm:$0xff] %v1109
        %1174 = vst [vmem:[%s310 + $0xf0] sm:$0xff] %v1110
        %1175 = vst [vmem:[%s310 + $0xf8] sm:$0xff] %v1111
        %1176 = vst [vmem:[%s310 + $0x100] sm:$0xff] %v1112
        %1177 = vst [vmem:[%s310 + $0x108] sm:$0xff] %v1113
        %1178 = vst [vmem:[%s310 + $0x110] sm:$0xff] %v1114
        %1179 = vst [vmem:[%s310 + $0x118] sm:$0xff] %v1115
        %1180 = vst [vmem:[%s310 + $0x120] sm:$0xff] %v1116
        %1181 = vst [vmem:[%s310 + $0x128] sm:$0xff] %v1117
        %1182 = vst [vmem:[%s310 + $0x130] sm:$0xff] %v1118
        %1183 = vst [vmem:[%s310 + $0x138] sm:$0xff] %v1119
        %1184 = vst [vmem:[%s310 + $0x140] sm:$0xff] %v1120
        %1185 = vst [vmem:[%s310 + $0x148] sm:$0xff] %v1121
        %1186 = vst [vmem:[%s310 + $0x150] sm:$0xff] %v1122
        %1187 = vst [vmem:[%s310 + $0x158] sm:$0xff] %v1123
        %1188 = vst [vmem:[%s310 + $0x160] sm:$0xff] %v1124
        %1189 = vst [vmem:[%s310 + $0x168] sm:$0xff] %v1125
        %1190 = vst [vmem:[%s310 + $0x170] sm:$0xff] %v1126
        %1191 = vst [vmem:[%s310 + $0x178] sm:$0xff] %v1127
        %1192 = vst [vmem:[%s310 + $0x180] sm:$0xff] %v1128
        %1193 = vst [vmem:[%s310 + $0x188] sm:$0xff] %v1129
        %1194 = vst [vmem:[%s310 + $0x190] sm:$0xff] %v1130
        %1195 = vst [vmem:[%s310 + $0x198] sm:$0xff] %v1131
        %1196 = vst [vmem:[%s310 + $0x1a0] sm:$0xff] %v1132
        %1197 = vst [vmem:[%s310 + $0x1a8] sm:$0xff] %v1133
        %1198 = vst [vmem:[%s310 + $0x1b0] sm:$0xff] %v1134
        %1199 = vst [vmem:[%s310 + $0x1b8] sm:$0xff] %v1135
        %1200 = vst [vmem:[%s310 + $0x1c0] sm:$0xff] %v1136
        %1201 = vst [vmem:[%s310 + $0x1c8] sm:$0xff] %v1137
        %1202 = vst [vmem:[%s310 + $0x1d0] sm:$0xff] %v1138
        %1203 = vst [vmem:[%s310 + $0x1d8] sm:$0xff] %v1139
        %1204 = vst [vmem:[%s310 + $0x1e0] sm:$0xff] %v1140
        %1205 = vst [vmem:[%s310 + $0x1e8] sm:$0xff] %v1141
        %1206 = vst [vmem:[%s310 + $0x1f0] sm:$0xff] %v1142
        %1207 = vst [vmem:[%s310 + $0x1f8] sm:$0xff] %v1143
        %s1208 = sand.u32 %s164, 1
        %s1209 = scalar_lea.sflag [#allocation4], %s1208
        %s1210 = sand.u32 %s164, 1
        %s1211 = smul.addr %s1210, 512
        %s1212 = scalar_lea.vmem [#allocation10], %s1211
        // Predicated region
        $region61: #{image_decoder_forward.1} parent=43 // pred_check
          %p1213 = pneg %p174
        $region62: #{image_decoder_forward.1} parent=43 // pred_check_branch
          %1215 = sbr.rel (%p1213) target = $region64
        $region63: #{image_decoder_forward.1} parent=43 // pred_region
          %s1217 = ssub.s32 8192, 8192
          %1218 = vsyncadd %s1209, %s1217
          %s1219 = smul.addr %s25, 64
          %s1220 = smul.addr %s1219, 128
          %s1221 = scalar_lea.hbm %s6, %s1220
          %s1222 = sshll.u32 %s1212, 4
          %s1223 = int_to_ptr.vmem [resolvable:$true] %s1222
          %1228 = dma.vmem_to_hbm [thread:$0]  %s1223, 8192, %s1221, %s1209, 1024, 1024, 64
        $region64: #{image_decoder_forward.1} parent=43 // pred_fallthru
          _
      $region44: #{image_decoder_forward.1} parent=5 // pred_fallthru
        _
      %p1229 = scmp.le.s32.totalorder 2, %s20
      // Predicated region
      $region65: #{image_decoder_forward.1} parent=5 // pred_check
        %p1230 = pneg %p1229
      $region66: #{image_decoder_forward.1} parent=5 // pred_check_branch
        %1232 = sbr.rel (%p1230) target = $region68
      $region67: #{image_decoder_forward.1} parent=5 // pred_region
        %s1233 = ssub.s32 %s20, 2
        // Predicated region
        $region69: #{image_decoder_forward.1} parent=67 // pred_check
          %p1234 = pneg %p180
        $region70: #{image_decoder_forward.1} parent=67 // pred_check_branch
          %1236 = sbr.rel (%p1234) target = $region72
        $region71: #{image_decoder_forward.1} parent=67 // pred_region
          %s1237 = sand.u32 %s165, 1
          %s1238 = scalar_lea.sflag [#allocation4], %s1237
          %s1239 = sand.u32 %s165, 1
          %s1240 = smul.addr %s1239, 512
          %s1241 = scalar_lea.vmem [#allocation10], %s1240
          %1242 = dma.done %s1238, 8192
        $region72: #{image_decoder_forward.1} parent=67 // pred_fallthru
          _
      $region68: #{image_decoder_forward.1} parent=5 // pred_fallthru
        _
    $region6: #{image_decoder_forward.1} parent=1 // loop_footer
      %s24 = sadd.s32 1, %s20
    $region7: #{image_decoder_forward.1} parent=1 // loop_footer_branch
      %19 = sbr.rel target = $region3
    $region8: #{image_decoder_forward.1} parent=1 // loop_exit
      _
    %1243 = vsyncpa [#allocation3], 1
    %s1244 = scalar_lea.sflag [#allocation3], 1
    %1245 = vsyncpa %s1244, 1
    %1246 = vsyncpa [#allocation6], 1
    %1247 = vsyncpa [#allocation9], 1
    %1248 = vsyncpa [#allocation4], 1
    %s1249 = scalar_lea.sflag [#allocation4], 1
    %1250 = vsyncpa %s1249, 1

</llo_original>
